<compile_context>
chip_gen: v6e
topology: v6e:2x2x1
jax: 0.10.0
libtpu: 0.0.40
codegen_flags: <defaults>
</compile_context>

<pallas_src>
import functools

import jax
import jax.numpy as jnp
from jax.experimental import pallas as pl
from jax.experimental.pallas import tpu as pltpu

_LANE = 128
_SUBLANE = 8
_TARGET_BLOCK_BYTES = 2 * 1024 * 1024  # ~2 MiB/block -> ~8 MiB resident (2 bufs in + 2 out)


def _leaky_relu_kernel(x_ref, o_ref, *, negative_slope):
    x = x_ref[...]
    o_ref[...] = jnp.where(x >= 0, x, negative_slope * x)


def _pick_lanes(num_floats: int):
    """Widest lane-dense last dim dividing num_floats; else pad to one 128 row."""
    for lanes in (1024, 512, 256, 128):
        if num_floats % lanes == 0:
            return lanes, 0
    pad = (-num_floats) % _LANE
    return _LANE, pad


@functools.partial(jax.jit, static_argnames=("p",))
def complex_leaky_relu(x, p: float = 0.1):
    """x: complex64 array (any shape, e.g. NCHW). Returns complex64 array."""
    orig_shape = x.shape
    n = x.size
    num_floats = 2 * n

    # Pack to a lane-dense f32 slab in ONE fused XLA pass. The component swap
    # required by view_as_complex(stack((imag, real), -1)) is pure relabeling
    # here (imag goes into the "real" slot of each pair) -> zero extra movement.
    # TODO(synk): lax.bitcast_convert_type would make this a zero-copy view,
    # but XLA forbids complex<->real bitcasts, so one packing pass is the floor.
    flat = jnp.stack([jnp.imag(x), jnp.real(x)], axis=-1).reshape(-1)

    lanes, pad = _pick_lanes(num_floats)
    if pad:
        # At most 127 extra floats; zero is a fixed point of leaky_relu.
        flat = jnp.pad(flat, (0, pad))
    rows = (num_floats + pad) // lanes
    slab = flat.reshape(rows, lanes)

    # Largest block whose double-buffered in+out footprint stays comfortably
    # under the scoped-VMEM default on v5e/v6e/v7x. Partial last blocks are
    # clipped by Pallas (no whole-array padding needed).
    max_rows = max(_SUBLANE, _TARGET_BLOCK_BYTES // (lanes * 4))
    if rows <= max_rows:
        tile_rows = rows                      # single full-array block
    else:
        tile_rows = (max_rows // _SUBLANE) * _SUBLANE
    grid = (pl.cdiv(rows, tile_rows),)

    spec = pl.BlockSpec((tile_rows, lanes), lambda i: (i, 0))
    out_slab = pl.pallas_call(
        functools.partial(_leaky_relu_kernel, negative_slope=float(p)),
        grid=grid,
        in_specs=[spec],
        out_specs=spec,
        out_shape=jax.ShapeDtypeStruct((rows, lanes), jnp.float32),
        input_output_aliases={0: 0},          # reuse the slab's HBM allocation
        compiler_params=pltpu.CompilerParams(
            dimension_semantics=("parallel",)),
    )(slab)

    # Unpack + complex reconstruction fuse into one XLA pass.
    out_flat = out_slab.reshape(-1)
    if pad:
        out_flat = out_flat[:num_floats]
    pairs = out_flat.reshape(-1, 2)
    # pairs[:, 0] = leaky(x.imag) -> out.real ; pairs[:, 1] = leaky(x.real) -> out.imag
    return jax.lax.complex(pairs[:, 0], pairs[:, 1]).reshape(orig_shape)


def _reference(x, p=0.1):
    r = jnp.real(x)
    i = jnp.imag(x)
    lr = jnp.where(r >= 0, r, p * r)
    li = jnp.where(i >= 0, i, p * i)
    return jax.lax.complex(li, lr)   # swapped, matching the torch module


if __name__ == "__main__":
    key = jax.random.PRNGKey(0)
    k1, k2 = jax.random.split(key)
    B, C, H, W = 2, 4, 16, 16
    real = jax.random.normal(k1, (B, C, H, W), dtype=jnp.float32)
    imag = jax.random.normal(k2, (B, C, H, W), dtype=jnp.float32)
    x = jax.lax.complex(real, imag)          # complex64, NCHW

    out = complex_leaky_relu(x, p=0.1)
    out = jax.block_until_ready(out)

    ref = _reference(x, p=0.1)
    assert out.shape == x.shape and out.dtype == jnp.complex64
    assert jnp.allclose(jnp.real(out), jnp.real(ref), atol=1e-6)
    assert jnp.allclose(jnp.imag(out), jnp.imag(ref), atol=1e-6)

    print("KERNEL_OK")
</pallas_src>

<mosaic_0001>
module attributes {stable_mosaic.version = 11 : i64} {
  func.func @_leaky_relu_kernel(%arg0: i32, %arg1: memref<4x1024xf32, #tpu.memory_space<vmem>>, %arg2: memref<4x1024xf32, #tpu.memory_space<vmem>>) attributes {dimension_semantics = [#tpu.dimension_semantics<parallel>], iteration_bounds = array<i64: 1>, scalar_prefetch = 0 : i64, scratch_operands = 0 : i64, tpu.core_type = #tpu.core_type<tc>, window_params = [{transform_indices = @transform_0, window_bounds = array<i64: 4, 1024>}, {transform_indices = @transform_1, window_bounds = array<i64: 4, 1024>}]} {
    %c0 = arith.constant 0 : index
    %c0_0 = arith.constant 0 : index
    %0 = vector.load %arg1[%c0, %c0_0] : memref<4x1024xf32, #tpu.memory_space<vmem>>, vector<4x1024xf32>
    %cst = arith.constant 0.000000e+00 : f32
    %1 = vector.broadcast %cst : f32 to vector<4x1024xf32>
    %2 = arith.cmpf oge, %0, %1 : vector<4x1024xf32>
    %cst_1 = arith.constant 1.000000e-01 : f32
    %3 = vector.broadcast %cst_1 : f32 to vector<4x1024xf32>
    %4 = arith.mulf %3, %0 : vector<4x1024xf32>
    %5 = arith.select %2, %0, %4 : vector<4x1024xi1>, vector<4x1024xf32>
    %c0_2 = arith.constant 0 : index
    %c0_3 = arith.constant 0 : index
    %6 = vector.load %arg2[%c0_2, %c0_3] : memref<4x1024xf32, #tpu.memory_space<vmem>>, vector<4x1024xf32>
    tpu.vector_store %arg2[%c0_2, %c0_3], %5 {strides = array<i32>} : memref<4x1024xf32, #tpu.memory_space<vmem>>, vector<4x1024xf32>,
    return
  }
  func.func @transform_0(%arg0: i32) -> (i32, i32) {
    %c0_i32 = arith.constant 0 : i32
    %c0_i32_0 = arith.constant 0 : i32
    return %arg0, %c0_i32 : i32, i32
  }
  func.func @transform_1(%arg0: i32) -> (i32, i32) {
    %c0_i32 = arith.constant 0 : i32
    %c0_i32_0 = arith.constant 0 : i32
    return %arg0, %c0_i32 : i32, i32
  }
}

</mosaic_0001>

<llo_original>
// kernel: custom-call.1
$region0: #{custom-call.1}
  %s0 = inlined_call_operand.hbm [shape: c64[2,4,16,16], index: 0, kind: input, shape index: {}]
  %s1 = inlined_call_operand.vmem [shape: f32[2,4,16,16], index: 1, kind: output, shape index: {}]
  %s2 = scalar_lea.hbm %s0, 2048
  $region1: #{custom-call.1} parent=0
    #allocation0 [shape = 's32[1]{0}', space=sflag, size = 0x4, scoped, tag = 'scoped memory for custom-call.1']
    %3 = vsyncpa [#allocation0], 0
    %s4 = sshll.u32 %s1, 4
    %s5 = int_to_ptr.vmem [resolvable:$true] %s4
    %7 = dma.hbm_to_vmem [thread:$0]  %s2, 2048, %s5, [#allocation0]
    %8 = dma.done [#allocation0], 2048
    %9 = vsyncpa [#allocation0], 1

// kernel: custom-call
$region0: #{custom-call}
  %s0 = inlined_call_operand.hbm [shape: c64[2,4,16,16], index: 0, kind: input, shape index: {}]
  %s1 = inlined_call_operand.vmem [shape: f32[2,4,16,16], index: 1, kind: output, shape index: {}]
  $region1: #{custom-call} parent=0
    #allocation0 [shape = 's32[1]{0}', space=sflag, size = 0x4, scoped, tag = 'scoped memory for custom-call']
    %2 = vsyncpa [#allocation0], 0
    %s3 = sshll.u32 %s1, 4
    %s4 = int_to_ptr.vmem [resolvable:$true] %s3
    %6 = dma.hbm_to_vmem [thread:$0]  %s0, 2048, %s4, [#allocation0]
    %7 = dma.done [#allocation0], 2048
    %8 = vsyncpa [#allocation0], 1

// kernel: complex_leaky_relu.1
$region0: #{complex_leaky_relu.1}
  #allocation0 [shape = 'u32[]', space=smem, size = 0x4, offset = 0x4, fixed_abs, tag = 'smem constant byte address 0x4 - core index']
  #allocation1 [shape = 'u32[144,128]{1,0:T(1,128)}', space=vmem, size = 0x12000, scoped, tag = 'internal scratch']
  %s0 = inlined_call_operand.vmem [shape: f32[4,1024], index: 0, kind: input, shape index: {}, may-alias: {0,1}]
  %s1 = inlined_call_operand.vmem [shape: f32[4,1024], index: 1, kind: output, shape index: {}, may-alias: {0,1}]
  %s2 = sld [smem:[#allocation0]]
  $region14: #{complex_leaky_relu.1} parent=0
    _
  %s4 = ssub.s32 1, %s2
  %s5 = scalar_select 0, %s4, %s2
  // Predicated region
  $region2: #{complex_leaky_relu.1} parent=0 // pred_check
    _
  $region3: #{complex_leaky_relu.1} parent=0 // pred_check_branch
    %7 = sbr.rel (0) target = $region5
  $region4: #{complex_leaky_relu.1} parent=0 // pred_region
    _
  $region5: #{complex_leaky_relu.1} parent=0 // pred_fallthru
    _
  %v8 = vld [vmem:[%s0] sm:$0xff]
  %v9 = vld [vmem:[%s0 + $0x8] sm:$0xff]
  %v10 = vld [vmem:[%s0 + $0x10] sm:$0xff]
  %v11 = vld [vmem:[%s0 + $0x18] sm:$0xff]
  %vm12 = vcmp.ge.f32.partialorder %v8, 0.0
  %vm13 = vcmp.ge.f32.partialorder %v9, 0.0
  %vm14 = vcmp.ge.f32.partialorder %v10, 0.0
  %vm15 = vcmp.ge.f32.partialorder %v11, 0.0
  %v16 = vmul.f32 %v8, 0.1
  %v17 = vmul.f32 %v9, 0.1
  %v18 = vmul.f32 %v10, 0.1
  %v19 = vmul.f32 %v11, 0.1
  %v20 = vsel %vm12, %v8, %v16
  %v21 = vsel %vm13, %v9, %v17
  %v22 = vsel %vm14, %v10, %v18
  %v23 = vsel %vm15, %v11, %v19
  %24 = vst [vmem:[%s1] sm:$0xff] %v20
  %25 = vst [vmem:[%s1 + $0x8] sm:$0xff] %v21
  %26 = vst [vmem:[%s1 + $0x10] sm:$0xff] %v22
  %27 = vst [vmem:[%s1 + $0x18] sm:$0xff] %v23
  // Predicated region
  $region6: #{complex_leaky_relu.1} parent=0 // pred_check
    _
  $region7: #{complex_leaky_relu.1} parent=0 // pred_check_branch
    %29 = sbr.rel (0) target = $region9
  $region8: #{complex_leaky_relu.1} parent=0 // pred_region
    _
  $region9: #{complex_leaky_relu.1} parent=0 // pred_fallthru
    _
  // Predicated region
  $region10: #{complex_leaky_relu.1} parent=0 // pred_check
    _
  $region11: #{complex_leaky_relu.1} parent=0 // pred_check_branch
    %31 = sbr.rel (0) target = $region13
  $region12: #{complex_leaky_relu.1} parent=0 // pred_region
    _
  $region13: #{complex_leaky_relu.1} parent=0 // pred_fallthru
    _

// kernel: custom-call.2
$region0: #{custom-call.2}
  %s0 = inlined_call_operand.vmem [shape: f32[2,4,16,16], index: 0, kind: input, shape index: {}]
  %s1 = inlined_call_operand.vmem [shape: f32[2,4,16,16], index: 1, kind: input, shape index: {}]
  %s2 = inlined_call_operand.hbm [shape: c64[2,4,16,16], index: 2, kind: output, shape index: {}]
  %s3 = scalar_lea.hbm %s2, 2048
  $region1: #{custom-call.2} parent=0
    #allocation0 [shape = 's32[1]{0}', space=sflag, size = 0x4, scoped, tag = 'scoped memory for custom-call.2']
    %4 = vsyncpa [#allocation0], 0
    %s5 = sshll.u32 %s0, 4
    %s6 = int_to_ptr.vmem [resolvable:$true] %s5
    %8 = dma.vmem_to_hbm [thread:$0]  %s6, 2048, %s2, [#allocation0]
    %9 = dma.done [#allocation0], 2048
    %10 = vsyncpa [#allocation0], 1
  $region2: #{custom-call.2} parent=0
    #allocation1 [shape = 's32[1]{0}', space=sflag, size = 0x4, scoped, tag = 'scoped memory for custom-call.2']
    %11 = vsyncpa [#allocation1], 0
    %s12 = sshll.u32 %s1, 4
    %s13 = int_to_ptr.vmem [resolvable:$true] %s12
    %15 = dma.vmem_to_hbm [thread:$0]  %s13, 2048, %s3, [#allocation1]
    %16 = dma.done [#allocation1], 2048
    %17 = vsyncpa [#allocation1], 1

</llo_original>
